<compile_context>
chip_gen: v6e
topology: v6e:2x2x1
jax: 0.10.0
libtpu: 0.0.40
codegen_flags: <defaults>
</compile_context>

<pallas_src>
import functools
import math

import jax
import jax.numpy as jnp
from jax.experimental import pallas as pl
from jax.experimental.pallas import tpu as pltpu


def _mlp_kernel(x8_ref, w1b_ref, w2_ref, b2_ref, w3_ref, b3_ref, o_ref):
    cdt = w1b_ref.dtype                       # compute dtype (bf16 or f32)
    neg_slope = jnp.asarray(0.2, dtype=cdt)

    # Layer 1 (3 -> H0), bias folded in via the homogeneous ones-row: MXU,
    # f32 accumulate.  x8 rows 0..2 = x.T, row 3 = 1, rows 4..7 = 0.
    h = jnp.dot(w1b_ref[...], x8_ref[...],
                preferred_element_type=jnp.float32)          # (H0, Bt) f32
    h = h.astype(cdt)
    h = jnp.maximum(h, neg_slope * h)                        # LeakyReLU(0.2)

    # Layer 2 (H0 -> H1): MXU, f32 accumulate; bias + activation in cdt
    # (packed bf16 VALU ops on v6e/v7x).
    h2 = jnp.dot(w2_ref[...], h,
                 preferred_element_type=jnp.float32).astype(cdt)
    h2 = h2 + b2_ref[...]
    h2 = jnp.maximum(h2, neg_slope * h2)                     # LeakyReLU(0.2)

    # Layer 3 (H1 -> 3, output rows zero-padded to 8): MXU, f32 bias/out.
    out = jnp.dot(w3_ref[...], h2,
                  preferred_element_type=jnp.float32) + b3_ref[...]
    o_ref[...] = out.astype(o_ref.dtype)                     # (8, Bt)


def _round_up(a, m):
    return (a + m - 1) // m * m


def _choose_tile(B, tm):
    """Lane-dense batch tile: multiple of 128, <= tm, <= 16384, and chosen so
    medium/large batches get >= 2 grid steps (v7x megacore sharding)."""
    B128 = _round_up(max(B, 1), 128)
    if B128 <= 128:
        return 128
    half = _round_up(-(-B128 // 2), 128)      # ceil(B128/2) rounded to 128
    tile = min(tm, half, 16384)
    return max(128, _round_up(tile, 128))


def pack_params(params, use_bf16=True):
    """One-time packing of PyTorch-layout params for the kernel:
       w1b = [W1 | b1 | 0] (H0, 8); W3/b3 zero-padded to 8 output rows;
       matmul operands pre-cast to bf16 (default) so no per-call casts."""
    cdt = jnp.bfloat16 if use_bf16 else jnp.float32
    w1, b1 = params["w1"], params["b1"]       # (H0, 3), (H0,)
    w2, b2 = params["w2"], params["b2"]       # (H1, H0), (H1,)
    w3, b3 = params["w3"], params["b3"]       # (3, H1), (3,)
    H0, H1 = w1.shape[0], w2.shape[0]

    w1b = jnp.zeros((H0, 8), jnp.float32).at[:, :3].set(w1).at[:, 3].set(b1)
    w3p = jnp.zeros((8, H1), jnp.float32).at[:3, :].set(w3)
    b3p = jnp.zeros((8, 1), jnp.float32).at[:3, 0].set(b3)

    return {
        "w1b": w1b.astype(cdt),               # (H0, 8)  compute dtype
        "w2": w2.astype(cdt),                 # (H1, H0) compute dtype
        "b2": b2.reshape(H1, 1).astype(cdt),  # (H1, 1)  compute dtype
        "w3": w3p.astype(cdt),                # (8, H1)  compute dtype
        "b3": b3p,                            # (8, 1)   f32
    }


@functools.partial(jax.jit, static_argnames=("tm",))
def position_model_forward(x, packed, *, tm=4096):
    """x: (B, 3) float32. packed: output of pack_params(). Returns (B, 3)."""
    B, F = x.shape
    assert F == 3
    cdt = packed["w1b"].dtype
    H0, H1 = packed["w2"].shape[1], packed["w2"].shape[0]

    tile = _choose_tile(B, tm)
    B_pad = _round_up(B, tile)
    grid = (B_pad // tile,)

    # Homogeneous, lane-dense input: (8, B_pad) with rows 0..2 = x.T, row 3 = 1.
    # Under jit the transpose/concat/pad fuse into one pass over x.
    xT = x.T.astype(cdt)                                      # (3, B)
    x8 = jnp.concatenate(
        [xT, jnp.ones((1, B), cdt), jnp.zeros((4, B), cdt)], axis=0)
    x8 = jnp.pad(x8, ((0, 0), (0, B_pad - B)))                # (8, B_pad)

    def full(shape):
        # Constant block index -> block fetched once, resident across the grid.
        return pl.BlockSpec(shape, lambda i: (0, 0))

    out8 = pl.pallas_call(
        _mlp_kernel,
        out_shape=jax.ShapeDtypeStruct((8, B_pad), x.dtype),
        grid_spec=pltpu.PrefetchScalarGridSpec(
            num_scalar_prefetch=0,
            grid=grid,
            in_specs=[
                pl.BlockSpec((8, tile), lambda i: (0, i)),    # x8 tile
                full((H0, 8)),                                # w1b (W1 | b1)
                full((H1, H0)), full((H1, 1)),                # layer 2
                full((8, H1)), full((8, 1)),                  # layer 3 (padded)
            ],
            out_specs=pl.BlockSpec((8, tile), lambda i: (0, i)),
        ),
        compiler_params=pltpu.CompilerParams(
            dimension_semantics=("parallel",),
            vmem_limit_bytes=48 * 1024 * 1024,
        ),
    )(x8, packed["w1b"], packed["w2"], packed["b2"], packed["w3"], packed["b3"])

    # Rows 3..7 are zero padding; padded batch columns are sliced off.
    return out8[:3, :B].T


def init_params(key, hidden_size=(128, 128)):
    """PyTorch nn.Linear-style init: W (out, in), b (out,), uniform +-1/sqrt(fan_in)."""
    dims = [3] + list(hidden_size) + [3]
    params = {}
    keys = jax.random.split(key, 2 * (len(dims) - 1))
    for li in range(len(dims) - 1):
        fan_in, fan_out = dims[li], dims[li + 1]
        bound = 1.0 / math.sqrt(fan_in)
        params[f"w{li + 1}"] = jax.random.uniform(
            keys[2 * li], (fan_out, fan_in), jnp.float32, -bound, bound)
        params[f"b{li + 1}"] = jax.random.uniform(
            keys[2 * li + 1], (fan_out,), jnp.float32, -bound, bound)
    return params


def reference_forward(x, params):
    """Pure-JAX reference (PyTorch semantics: x @ W.T + b)."""
    h = x @ params["w1"].T + params["b1"]
    h = jnp.where(h > 0, h, 0.2 * h)
    h = h @ params["w2"].T + params["b2"]
    h = jnp.where(h > 0, h, 0.2 * h)
    return h @ params["w3"].T + params["b3"]


if __name__ == "__main__":
    key = jax.random.PRNGKey(0)
    pkey, xkey = jax.random.split(key)

    params = init_params(pkey, hidden_size=(128, 128))

    # Small batch (padded to one 128-wide lane tile).
    B = 8
    x = jax.random.normal(xkey, (B, 3), jnp.float32)
    ref = reference_forward(x, params)

    # f32-matmul path: tight tolerance.
    packed_f32 = pack_params(params, use_bf16=False)
    out_f32 = jax.block_until_ready(position_model_forward(x, packed_f32))
    assert out_f32.shape == (B, 3)
    assert jnp.allclose(out_f32, ref, atol=1e-4, rtol=1e-4), "f32 path mismatch"

    # bf16-matmul path (default, MXU/VPU-friendly on v6e/v7x): looser tolerance.
    packed_bf16 = pack_params(params, use_bf16=True)
    out_bf16 = jax.block_until_ready(position_model_forward(x, packed_bf16))
    assert jnp.allclose(out_bf16, ref, atol=5e-2, rtol=5e-2), "bf16 path mismatch"

    # Larger, non-multiple batch: exercises padding + >=2-step parallel grid.
    B2 = 1000
    x2 = jax.random.normal(jax.random.PRNGKey(1), (B2, 3), jnp.float32)
    out2 = jax.block_until_ready(position_model_forward(x2, packed_bf16, tm=512))
    ref2 = reference_forward(x2, params)
    assert out2.shape == (B2, 3)
    assert jnp.allclose(out2, ref2, atol=5e-2, rtol=5e-2), "large-batch mismatch"

    print("KERNEL_OK")
</pallas_src>

<mosaic_0001>
module attributes {stable_mosaic.version = 11 : i64} {
  func.func @_mlp_kernel(%arg0: i32, %arg1: memref<8x128xf32, #tpu.memory_space<vmem>>, %arg2: memref<128x8xf32, #tpu.memory_space<vmem>>, %arg3: memref<128x128xf32, #tpu.memory_space<vmem>>, %arg4: memref<128x1xf32, #tpu.memory_space<vmem>>, %arg5: memref<8x128xf32, #tpu.memory_space<vmem>>, %arg6: memref<8x1xf32, #tpu.memory_space<vmem>>, %arg7: memref<8x128xf32, #tpu.memory_space<vmem>>) attributes {dimension_semantics = [#tpu.dimension_semantics<parallel>], iteration_bounds = array<i64: 1>, scalar_prefetch = 0 : i64, scratch_operands = 0 : i64, tpu.core_type = #tpu.core_type<tc>, window_params = [{transform_indices = @transform_0, window_bounds = array<i64: 8, 128>}, {pipeline_mode = #tpu.pipeline_mode<synchronous>, transform_indices = @transform_1, window_bounds = array<i64: 128, 8>}, {pipeline_mode = #tpu.pipeline_mode<synchronous>, transform_indices = @transform_2, window_bounds = array<i64: 128, 128>}, {pipeline_mode = #tpu.pipeline_mode<synchronous>, transform_indices = @transform_3, window_bounds = array<i64: 128, 1>}, {pipeline_mode = #tpu.pipeline_mode<synchronous>, transform_indices = @transform_4, window_bounds = array<i64: 8, 128>}, {pipeline_mode = #tpu.pipeline_mode<synchronous>, transform_indices = @transform_5, window_bounds = array<i64: 8, 1>}, {transform_indices = @transform_6, window_bounds = array<i64: 8, 128>}]} {
    %c0 = arith.constant 0 : index
    %c0_0 = arith.constant 0 : index
    %0 = vector.load %arg2[%c0, %c0_0] : memref<128x8xf32, #tpu.memory_space<vmem>>, vector<128x8xf32>
    %c0_1 = arith.constant 0 : index
    %c0_2 = arith.constant 0 : index
    %1 = vector.load %arg1[%c0_1, %c0_2] : memref<8x128xf32, #tpu.memory_space<vmem>>, vector<8x128xf32>
    %cst = arith.constant dense<0.000000e+00> : vector<128x128xf32>
    %2 = tpu.matmul %0, %1, %cst {dimension_numbers = #tpu.dot_dimension_numbers<[1], [0], [0], [1], [0, 0, 1, 1], [], []>} : vector<128x8xf32>, vector<8x128xf32>, vector<128x128xf32> -> vector<128x128xf32>
    %cst_3 = arith.constant 2.000000e-01 : f32
    %3 = vector.broadcast %cst_3 : f32 to vector<128x128xf32>
    %4 = arith.mulf %3, %2 : vector<128x128xf32>
    %5 = arith.maximumf %2, %4 : vector<128x128xf32>
    %c0_4 = arith.constant 0 : index
    %c0_5 = arith.constant 0 : index
    %6 = vector.load %arg3[%c0_4, %c0_5] : memref<128x128xf32, #tpu.memory_space<vmem>>, vector<128x128xf32>
    %cst_6 = arith.constant dense<0.000000e+00> : vector<128x128xf32>
    %7 = tpu.matmul %6, %5, %cst_6 {dimension_numbers = #tpu.dot_dimension_numbers<[1], [0], [0], [1], [0, 0, 1, 1], [], []>} : vector<128x128xf32>, vector<128x128xf32>, vector<128x128xf32> -> vector<128x128xf32>
    %c0_7 = arith.constant 0 : index
    %c0_8 = arith.constant 0 : index
    %8 = vector.load %arg4[%c0_7, %c0_8] : memref<128x1xf32, #tpu.memory_space<vmem>>, vector<128x1xf32>
    %9 = vector.broadcast %8 : vector<128x1xf32> to vector<128x128xf32>
    %10 = arith.addf %7, %9 : vector<128x128xf32>
    %cst_9 = arith.constant 2.000000e-01 : f32
    %11 = vector.broadcast %cst_9 : f32 to vector<128x128xf32>
    %12 = arith.mulf %11, %10 : vector<128x128xf32>
    %13 = arith.maximumf %10, %12 : vector<128x128xf32>
    %c0_10 = arith.constant 0 : index
    %c0_11 = arith.constant 0 : index
    %14 = vector.load %arg5[%c0_10, %c0_11] : memref<8x128xf32, #tpu.memory_space<vmem>>, vector<8x128xf32>
    %cst_12 = arith.constant dense<0.000000e+00> : vector<8x128xf32>
    %15 = tpu.matmul %14, %13, %cst_12 {dimension_numbers = #tpu.dot_dimension_numbers<[1], [0], [0], [1], [0, 0, 1, 1], [], []>} : vector<8x128xf32>, vector<128x128xf32>, vector<8x128xf32> -> vector<8x128xf32>
    %c0_13 = arith.constant 0 : index
    %c0_14 = arith.constant 0 : index
    %16 = vector.load %arg6[%c0_13, %c0_14] : memref<8x1xf32, #tpu.memory_space<vmem>>, vector<8x1xf32>
    %17 = vector.broadcast %16 : vector<8x1xf32> to vector<8x128xf32>
    %18 = arith.addf %15, %17 : vector<8x128xf32>
    %c0_15 = arith.constant 0 : index
    %c0_16 = arith.constant 0 : index
    %19 = vector.load %arg7[%c0_15, %c0_16] : memref<8x128xf32, #tpu.memory_space<vmem>>, vector<8x128xf32>
    tpu.vector_store %arg7[%c0_15, %c0_16], %18 {strides = array<i32>} : memref<8x128xf32, #tpu.memory_space<vmem>>, vector<8x128xf32>,
    return
  }
  func.func @transform_0(%arg0: i32) -> (i32, i32) {
    %c0_i32 = arith.constant 0 : i32
    %c0_i32_0 = arith.constant 0 : i32
    return %c0_i32, %arg0 : i32, i32
  }
  func.func @transform_1(%arg0: i32) -> (i32, i32) {
    %c0_i32 = arith.constant 0 : i32
    %c0_i32_0 = arith.constant 0 : i32
    %c0_i32_1 = arith.constant 0 : i32
    return %c0_i32, %c0_i32_0 : i32, i32
  }
  func.func @transform_2(%arg0: i32) -> (i32, i32) {
    %c0_i32 = arith.constant 0 : i32
    %c0_i32_0 = arith.constant 0 : i32
    %c0_i32_1 = arith.constant 0 : i32
    return %c0_i32, %c0_i32_0 : i32, i32
  }
  func.func @transform_3(%arg0: i32) -> (i32, i32) {
    %c0_i32 = arith.constant 0 : i32
    %c0_i32_0 = arith.constant 0 : i32
    %c0_i32_1 = arith.constant 0 : i32
    return %c0_i32, %c0_i32_0 : i32, i32
  }
  func.func @transform_4(%arg0: i32) -> (i32, i32) {
    %c0_i32 = arith.constant 0 : i32
    %c0_i32_0 = arith.constant 0 : i32
    %c0_i32_1 = arith.constant 0 : i32
    return %c0_i32, %c0_i32_0 : i32, i32
  }
  func.func @transform_5(%arg0: i32) -> (i32, i32) {
    %c0_i32 = arith.constant 0 : i32
    %c0_i32_0 = arith.constant 0 : i32
    %c0_i32_1 = arith.constant 0 : i32
    return %c0_i32, %c0_i32_0 : i32, i32
  }
  func.func @transform_6(%arg0: i32) -> (i32, i32) {
    %c0_i32 = arith.constant 0 : i32
    %c0_i32_0 = arith.constant 0 : i32
    return %c0_i32, %arg0 : i32, i32
  }
}

</mosaic_0001>

<llo_original>
// kernel: position_model_forward.1
$region0: #{position_model_forward.1}
  #allocation0 [shape = 'u32[]', space=smem, size = 0x4, offset = 0x4, fixed_abs, tag = 'smem constant byte address 0x4 - core index']
  #allocation1 [shape = 'u32[144,128]{1,0:T(1,128)}', space=vmem, size = 0x12000, scoped, tag = 'internal scratch']
  %s0 = inlined_call_operand.vmem [shape: f32[8,128], index: 0, kind: input, shape index: {}]
  %s1 = inlined_call_operand.vmem [shape: f32[128,8], index: 1, kind: input, shape index: {}]
  %s2 = inlined_call_operand.vmem [shape: f32[128,128], index: 2, kind: input, shape index: {}]
  %s3 = inlined_call_operand.vmem [shape: f32[128,1], index: 3, kind: input, shape index: {}]
  %s4 = inlined_call_operand.vmem [shape: f32[8,128], index: 4, kind: input, shape index: {}]
  %s5 = inlined_call_operand.vmem [shape: f32[8,1], index: 5, kind: input, shape index: {}]
  %s6 = inlined_call_operand.vmem [shape: f32[8,128], index: 6, kind: output, shape index: {}]
  %s7 = sld [smem:[#allocation0]]
  $region34: #{position_model_forward.1} parent=0
    _
  %s9 = ssub.s32 1, %s7
  %s10 = scalar_select 0, %s9, %s7
  // Predicated region
  $region2: #{position_model_forward.1} parent=0 // pred_check
    _
  $region3: #{position_model_forward.1} parent=0 // pred_check_branch
    %12 = sbr.rel (0) target = $region5
  $region4: #{position_model_forward.1} parent=0 // pred_region
    _
  $region5: #{position_model_forward.1} parent=0 // pred_fallthru
    _
  // Predicated region
  $region6: #{position_model_forward.1} parent=0 // pred_check
    _
  $region7: #{position_model_forward.1} parent=0 // pred_check_branch
    %14 = sbr.rel (0) target = $region9
  $region8: #{position_model_forward.1} parent=0 // pred_region
    _
  $region9: #{position_model_forward.1} parent=0 // pred_fallthru
    _
  // Predicated region
  $region10: #{position_model_forward.1} parent=0 // pred_check
    _
  $region11: #{position_model_forward.1} parent=0 // pred_check_branch
    %16 = sbr.rel (0) target = $region13
  $region12: #{position_model_forward.1} parent=0 // pred_region
    _
  $region13: #{position_model_forward.1} parent=0 // pred_fallthru
    _
  // Predicated region
  $region14: #{position_model_forward.1} parent=0 // pred_check
    _
  $region15: #{position_model_forward.1} parent=0 // pred_check_branch
    %18 = sbr.rel (0) target = $region17
  $region16: #{position_model_forward.1} parent=0 // pred_region
    _
  $region17: #{position_model_forward.1} parent=0 // pred_fallthru
    _
  // Predicated region
  $region18: #{position_model_forward.1} parent=0 // pred_check
    _
  $region19: #{position_model_forward.1} parent=0 // pred_check_branch
    %20 = sbr.rel (0) target = $region21
  $region20: #{position_model_forward.1} parent=0 // pred_region
    _
  $region21: #{position_model_forward.1} parent=0 // pred_fallthru
    _
  // Predicated region
  $region22: #{position_model_forward.1} parent=0 // pred_check
    _
  $region23: #{position_model_forward.1} parent=0 // pred_check_branch
    %22 = sbr.rel (0) target = $region25
  $region24: #{position_model_forward.1} parent=0 // pred_region
    _
  $region25: #{position_model_forward.1} parent=0 // pred_fallthru
    _
  %v23 = vld [vmem:[%s1] sm:$0xff]
  %v24 = vld [vmem:[%s1 + $0x8] sm:$0xff]
  %v25 = vld [vmem:[%s1 + $0x10] sm:$0xff]
  %v26 = vld [vmem:[%s1 + $0x18] sm:$0xff]
  %v27 = vld [vmem:[%s1 + $0x20] sm:$0xff]
  %v28 = vld [vmem:[%s1 + $0x28] sm:$0xff]
  %v29 = vld [vmem:[%s1 + $0x30] sm:$0xff]
  %v30 = vld [vmem:[%s1 + $0x38] sm:$0xff]
  %v31 = vld [vmem:[%s1 + $0x40] sm:$0xff]
  %v32 = vld [vmem:[%s1 + $0x48] sm:$0xff]
  %v33 = vld [vmem:[%s1 + $0x50] sm:$0xff]
  %v34 = vld [vmem:[%s1 + $0x58] sm:$0xff]
  %v35 = vld [vmem:[%s1 + $0x60] sm:$0xff]
  %v36 = vld [vmem:[%s1 + $0x68] sm:$0xff]
  %v37 = vld [vmem:[%s1 + $0x70] sm:$0xff]
  %v38 = vld [vmem:[%s1 + $0x78] sm:$0xff]
  %v39 = vld [vmem:[%s0] sm:$0xff]
  %vm40 = vcmask 64512
  %v42 = vsel %vm40, %v23, 0
  %v45 = vsel %vm40, %v24, 0
  %v48 = vsel %vm40, %v25, 0
  %v51 = vsel %vm40, %v26, 0
  %v54 = vsel %vm40, %v27, 0
  %v57 = vsel %vm40, %v28, 0
  %v60 = vsel %vm40, %v29, 0
  %v63 = vsel %vm40, %v30, 0
  %v66 = vsel %vm40, %v31, 0
  %v69 = vsel %vm40, %v32, 0
  %v72 = vsel %vm40, %v33, 0
  %v75 = vsel %vm40, %v34, 0
  %v78 = vsel %vm40, %v35, 0
  %v81 = vsel %vm40, %v36, 0
  %v84 = vsel %vm40, %v37, 0
  %v87 = vsel %vm40, %v38, 0
  %89 = vmatprep.subr.mxu0 0.0
  %90 = vmatpush1.msra.mxu0 0.0
  %91 = vmatprep.subr.mxu0 0.0
  %92 = vmatpush1.msra.mxu0 0.0
  %93 = vmatprep.subr.mxu0 0.0
  %94 = vmatpush1.msra.mxu0 0.0
  %95 = vmatprep.subr.mxu0 0.0
  %96 = vmatpush1.msra.mxu0 0.0
  %97 = vmatprep.subr.mxu0 0.0
  %98 = vmatpush1.msra.mxu0 0.0
  %99 = vmatprep.subr.mxu0 0.0
  %100 = vmatpush1.msra.mxu0 0.0
  %101 = vmatprep.subr.mxu0 0.0
  %102 = vmatpush1.msra.mxu0 0.0
  %103 = vmatprep.subr.mxu0 0.0
  %104 = vmatpush1.msra.mxu0 0.0
  %105 = vmatprep.subr.mxu0 0.0
  %106 = vmatpush1.msra.mxu0 0.0
  %107 = vmatprep.subr.mxu0 0.0
  %108 = vmatpush1.msra.mxu0 0.0
  %109 = vmatprep.subr.mxu0 0.0
  %110 = vmatpush1.msra.mxu0 0.0
  %111 = vmatprep.subr.mxu0 0.0
  %112 = vmatpush1.msra.mxu0 0.0
  %113 = vmatprep.subr.mxu0 0.0
  %114 = vmatpush1.msra.mxu0 0.0
  %115 = vmatprep.subr.mxu0 0.0
  %116 = vmatpush1.msra.mxu0 0.0
  %117 = vmatprep.subr.mxu0 0.0
  %118 = vmatpush1.msra.mxu0 0.0
  %119 = vmatprep.subr.mxu0 0.0
  %120 = vmatpush1.msra.mxu0 %v39
  %121 = vmatprep.subr.mxu0 0.0
  %122 = vmatpush2.msra.mxu0 0.0
  %123 = vmatprep.subr.mxu0 0.0
  %124 = vmatpush2.msra.mxu0 0.0
  %125 = vmatprep.subr.mxu0 0.0
  %126 = vmatpush2.msra.mxu0 0.0
  %127 = vmatprep.subr.mxu0 0.0
  %128 = vmatpush2.msra.mxu0 0.0
  %129 = vmatprep.subr.mxu0 0.0
  %130 = vmatpush2.msra.mxu0 0.0
  %131 = vmatprep.subr.mxu0 0.0
  %132 = vmatpush2.msra.mxu0 0.0
  %133 = vmatprep.subr.mxu0 0.0
  %134 = vmatpush2.msra.mxu0 0.0
  %135 = vmatprep.subr.mxu0 0.0
  %136 = vmatpush2.msra.mxu0 0.0
  %137 = vmatprep.subr.mxu0 0.0
  %138 = vmatpush2.msra.mxu0 0.0
  %139 = vmatprep.subr.mxu0 0.0
  %140 = vmatpush2.msra.mxu0 0.0
  %141 = vmatprep.subr.mxu0 0.0
  %142 = vmatpush2.msra.mxu0 0.0
  %143 = vmatprep.subr.mxu0 0.0
  %144 = vmatpush2.msra.mxu0 0.0
  %145 = vmatprep.subr.mxu0 0.0
  %146 = vmatpush2.msra.mxu0 0.0
  %147 = vmatprep.subr.mxu0 0.0
  %148 = vmatpush2.msra.mxu0 0.0
  %149 = vmatprep.subr.mxu0 0.0
  %150 = vmatpush2.msra.mxu0 0.0
  %151 = vmatprep.subr.mxu0 0.0
  %152 = vmatpush2.msra.mxu0 0.0
  %153 = vmatprep.mubr.f32.mxu0 0.0
  %154 = vmatmul.mubr.f32.gmra.mxu0 %v42
  %v155 = vpop.f32.mrf.mxu0
  %v156 = vadd.f32 0.0, %v155
  %v157 = vpop.f32.mrf.mxu0
  %158 = vmatprep.mubr.f32.mxu0 0.0
  %159 = vmatmul.mubr.f32.gmra.mxu0 %v45
  %v160 = vpop.f32.mrf.mxu0
  %v161 = vadd.f32 0.0, %v160
  %v162 = vpop.f32.mrf.mxu0
  %163 = vmatprep.mubr.f32.mxu0 0.0
  %164 = vmatmul.mubr.f32.gmra.mxu0 %v48
  %v165 = vpop.f32.mrf.mxu0
  %v166 = vadd.f32 0.0, %v165
  %v167 = vpop.f32.mrf.mxu0
  %168 = vmatprep.mubr.f32.mxu0 0.0
  %169 = vmatmul.mubr.f32.gmra.mxu0 %v51
  %v170 = vpop.f32.mrf.mxu0
  %v171 = vadd.f32 0.0, %v170
  %v172 = vpop.f32.mrf.mxu0
  %173 = vmatprep.mubr.f32.mxu0 0.0
  %174 = vmatmul.mubr.f32.gmra.mxu0 %v54
  %v175 = vpop.f32.mrf.mxu0
  %v176 = vadd.f32 0.0, %v175
  %v177 = vpop.f32.mrf.mxu0
  %178 = vmatprep.mubr.f32.mxu0 0.0
  %179 = vmatmul.mubr.f32.gmra.mxu0 %v57
  %v180 = vpop.f32.mrf.mxu0
  %v181 = vadd.f32 0.0, %v180
  %v182 = vpop.f32.mrf.mxu0
  %183 = vmatprep.mubr.f32.mxu0 0.0
  %184 = vmatmul.mubr.f32.gmra.mxu0 %v60
  %v185 = vpop.f32.mrf.mxu0
  %v186 = vadd.f32 0.0, %v185
  %v187 = vpop.f32.mrf.mxu0
  %188 = vmatprep.mubr.f32.mxu0 0.0
  %189 = vmatmul.mubr.f32.gmra.mxu0 %v63
  %v190 = vpop.f32.mrf.mxu0
  %v191 = vadd.f32 0.0, %v190
  %v192 = vpop.f32.mrf.mxu0
  %193 = vmatprep.mubr.f32.mxu0 0.0
  %194 = vmatmul.mubr.f32.gmra.mxu0 %v66
  %v195 = vpop.f32.mrf.mxu0
  %v196 = vadd.f32 0.0, %v195
  %v197 = vpop.f32.mrf.mxu0
  %198 = vmatprep.mubr.f32.mxu0 0.0
  %199 = vmatmul.mubr.f32.gmra.mxu0 %v69
  %v200 = vpop.f32.mrf.mxu0
  %v201 = vadd.f32 0.0, %v200
  %v202 = vpop.f32.mrf.mxu0
  %203 = vmatprep.mubr.f32.mxu0 0.0
  %204 = vmatmul.mubr.f32.gmra.mxu0 %v72
  %v205 = vpop.f32.mrf.mxu0
  %v206 = vadd.f32 0.0, %v205
  %v207 = vpop.f32.mrf.mxu0
  %208 = vmatprep.mubr.f32.mxu0 0.0
  %209 = vmatmul.mubr.f32.gmra.mxu0 %v75
  %v210 = vpop.f32.mrf.mxu0
  %v211 = vadd.f32 0.0, %v210
  %v212 = vpop.f32.mrf.mxu0
  %213 = vmatprep.mubr.f32.mxu0 0.0
  %214 = vmatmul.mubr.f32.gmra.mxu0 %v78
  %v215 = vpop.f32.mrf.mxu0
  %v216 = vadd.f32 0.0, %v215
  %v217 = vpop.f32.mrf.mxu0
  %218 = vmatprep.mubr.f32.mxu0 0.0
  %219 = vmatmul.mubr.f32.gmra.mxu0 %v81
  %v220 = vpop.f32.mrf.mxu0
  %v221 = vadd.f32 0.0, %v220
  %v222 = vpop.f32.mrf.mxu0
  %223 = vmatprep.mubr.f32.mxu0 0.0
  %224 = vmatmul.mubr.f32.gmra.mxu0 %v84
  %v225 = vpop.f32.mrf.mxu0
  %v226 = vadd.f32 0.0, %v225
  %v227 = vpop.f32.mrf.mxu0
  %228 = vmatprep.mubr.f32.mxu0 0.0
  %229 = vmatmul.mubr.f32.gmra.mxu0 %v87
  %v230 = vpop.f32.mrf.mxu0
  %v231 = vadd.f32 0.0, %v230
  %v232 = vpop.f32.mrf.mxu0
  %233 = vdwg.mxu0
  %v234 = vmul.f32 %v156, 0.2
  %v235 = vmul.f32 %v161, 0.2
  %v236 = vmul.f32 %v166, 0.2
  %v237 = vmul.f32 %v171, 0.2
  %v238 = vmul.f32 %v176, 0.2
  %v239 = vmul.f32 %v181, 0.2
  %v240 = vmul.f32 %v186, 0.2
  %v241 = vmul.f32 %v191, 0.2
  %v242 = vmul.f32 %v196, 0.2
  %v243 = vmul.f32 %v201, 0.2
  %v244 = vmul.f32 %v206, 0.2
  %v245 = vmul.f32 %v211, 0.2
  %v246 = vmul.f32 %v216, 0.2
  %v247 = vmul.f32 %v221, 0.2
  %v248 = vmul.f32 %v226, 0.2
  %v249 = vmul.f32 %v231, 0.2
  %v250 = vmax.f32 %v156, %v234
  %v251 = vmax.f32 %v161, %v235
  %v252 = vmax.f32 %v166, %v236
  %v253 = vmax.f32 %v171, %v237
  %v254 = vmax.f32 %v176, %v238
  %v255 = vmax.f32 %v181, %v239
  %v256 = vmax.f32 %v186, %v240
  %v257 = vmax.f32 %v191, %v241
  %v258 = vmax.f32 %v196, %v242
  %v259 = vmax.f32 %v201, %v243
  %v260 = vmax.f32 %v206, %v244
  %v261 = vmax.f32 %v211, %v245
  %v262 = vmax.f32 %v216, %v246
  %v263 = vmax.f32 %v221, %v247
  %v264 = vmax.f32 %v226, %v248
  %v265 = vmax.f32 %v231, %v249
  %v266 = vld [vmem:[%s2] sm:$0xff]
  %v267 = vld [vmem:[%s2 + $0x8] sm:$0xff]
  %v268 = vld [vmem:[%s2 + $0x10] sm:$0xff]
  %v269 = vld [vmem:[%s2 + $0x18] sm:$0xff]
  %v270 = vld [vmem:[%s2 + $0x20] sm:$0xff]
  %v271 = vld [vmem:[%s2 + $0x28] sm:$0xff]
  %v272 = vld [vmem:[%s2 + $0x30] sm:$0xff]
  %v273 = vld [vmem:[%s2 + $0x38] sm:$0xff]
  %v274 = vld [vmem:[%s2 + $0x40] sm:$0xff]
  %v275 = vld [vmem:[%s2 + $0x48] sm:$0xff]
  %v276 = vld [vmem:[%s2 + $0x50] sm:$0xff]
  %v277 = vld [vmem:[%s2 + $0x58] sm:$0xff]
  %v278 = vld [vmem:[%s2 + $0x60] sm:$0xff]
  %v279 = vld [vmem:[%s2 + $0x68] sm:$0xff]
  %v280 = vld [vmem:[%s2 + $0x70] sm:$0xff]
  %v281 = vld [vmem:[%s2 + $0x78] sm:$0xff]
  %v282 = vld [vmem:[%s3] sm:$0xff]
  %v283 = vld [vmem:[%s3 + $0x8] sm:$0xff]
  %v284 = vld [vmem:[%s3 + $0x10] sm:$0xff]
  %v285 = vld [vmem:[%s3 + $0x18] sm:$0xff]
  %v286 = vld [vmem:[%s3 + $0x20] sm:$0xff]
  %v287 = vld [vmem:[%s3 + $0x28] sm:$0xff]
  %v288 = vld [vmem:[%s3 + $0x30] sm:$0xff]
  %v289 = vld [vmem:[%s3 + $0x38] sm:$0xff]
  %v290 = vld [vmem:[%s3 + $0x40] sm:$0xff]
  %v291 = vld [vmem:[%s3 + $0x48] sm:$0xff]
  %v292 = vld [vmem:[%s3 + $0x50] sm:$0xff]
  %v293 = vld [vmem:[%s3 + $0x58] sm:$0xff]
  %v294 = vld [vmem:[%s3 + $0x60] sm:$0xff]
  %v295 = vld [vmem:[%s3 + $0x68] sm:$0xff]
  %v296 = vld [vmem:[%s3 + $0x70] sm:$0xff]
  %v297 = vld [vmem:[%s3 + $0x78] sm:$0xff]
  %299 = vset.pattern.permute.xlu0 0
  %300 = vperm.xlu0 %299, %v282
  %v301 = vpop.permute.xlu0 %300
  %304 = vset.pattern.permute.xlu0 0
  %305 = vperm.xlu0 %304, %v283
  %v306 = vpop.permute.xlu0 %305
  %309 = vset.pattern.permute.xlu0 0
  %310 = vperm.xlu0 %309, %v284
  %v311 = vpop.permute.xlu0 %310
  %314 = vset.pattern.permute.xlu0 0
  %315 = vperm.xlu0 %314, %v285
  %v316 = vpop.permute.xlu0 %315
  %319 = vset.pattern.permute.xlu0 0
  %320 = vperm.xlu0 %319, %v286
  %v321 = vpop.permute.xlu0 %320
  %324 = vset.pattern.permute.xlu0 0
  %325 = vperm.xlu0 %324, %v287
  %v326 = vpop.permute.xlu0 %325
  %329 = vset.pattern.permute.xlu0 0
  %330 = vperm.xlu0 %329, %v288
  %v331 = vpop.permute.xlu0 %330
  %334 = vset.pattern.permute.xlu0 0
  %335 = vperm.xlu0 %334, %v289
  %v336 = vpop.permute.xlu0 %335
  %339 = vset.pattern.permute.xlu0 0
  %340 = vperm.xlu0 %339, %v290
  %v341 = vpop.permute.xlu0 %340
  %344 = vset.pattern.permute.xlu0 0
  %345 = vperm.xlu0 %344, %v291
  %v346 = vpop.permute.xlu0 %345
  %349 = vset.pattern.permute.xlu0 0
  %350 = vperm.xlu0 %349, %v292
  %v351 = vpop.permute.xlu0 %350
  %354 = vset.pattern.permute.xlu0 0
  %355 = vperm.xlu0 %354, %v293
  %v356 = vpop.permute.xlu0 %355
  %359 = vset.pattern.permute.xlu0 0
  %360 = vperm.xlu0 %359, %v294
  %v361 = vpop.permute.xlu0 %360
  %364 = vset.pattern.permute.xlu0 0
  %365 = vperm.xlu0 %364, %v295
  %v366 = vpop.permute.xlu0 %365
  %369 = vset.pattern.permute.xlu0 0
  %370 = vperm.xlu0 %369, %v296
  %v371 = vpop.permute.xlu0 %370
  %374 = vset.pattern.permute.xlu0 0
  %375 = vperm.xlu0 %374, %v297
  %v376 = vpop.permute.xlu0 %375
  %378 = vmatprep.subr.mxu0 0.0
  %379 = vmatpush1.msra.mxu0 %v265
  %380 = vmatprep.subr.mxu0 0.0
  %381 = vmatpush1.msra.mxu0 %v264
  %382 = vmatprep.subr.mxu0 0.0
  %383 = vmatpush1.msra.mxu0 %v263
  %384 = vmatprep.subr.mxu0 0.0
  %385 = vmatpush1.msra.mxu0 %v262
  %386 = vmatprep.subr.mxu0 0.0
  %387 = vmatpush1.msra.mxu0 %v261
  %388 = vmatprep.subr.mxu0 0.0
  %389 = vmatpush1.msra.mxu0 %v260
  %390 = vmatprep.subr.mxu0 0.0
  %391 = vmatpush1.msra.mxu0 %v259
  %392 = vmatprep.subr.mxu0 0.0
  %393 = vmatpush1.msra.mxu0 %v258
  %394 = vmatprep.subr.mxu0 0.0
  %395 = vmatpush1.msra.mxu0 %v257
  %396 = vmatprep.subr.mxu0 0.0
  %397 = vmatpush1.msra.mxu0 %v256
  %398 = vmatprep.subr.mxu0 0.0
  %399 = vmatpush1.msra.mxu0 %v255
  %400 = vmatprep.subr.mxu0 0.0
  %401 = vmatpush1.msra.mxu0 %v254
  %402 = vmatprep.subr.mxu0 0.0
  %403 = vmatpush1.msra.mxu0 %v253
  %404 = vmatprep.subr.mxu0 0.0
  %405 = vmatpush1.msra.mxu0 %v252
  %406 = vmatprep.subr.mxu0 0.0
  %407 = vmatpush1.msra.mxu0 %v251
  %408 = vmatprep.subr.mxu0 0.0
  %409 = vmatpush1.msra.mxu0 %v250
  %410 = vmatprep.subr.mxu0 0.0
  %411 = vmatpush2.msra.mxu0 0.0
  %412 = vmatprep.subr.mxu0 0.0
  %413 = vmatpush2.msra.mxu0 0.0
  %414 = vmatprep.subr.mxu0 0.0
  %415 = vmatpush2.msra.mxu0 0.0
  %416 = vmatprep.subr.mxu0 0.0
  %417 = vmatpush2.msra.mxu0 0.0
  %418 = vmatprep.subr.mxu0 0.0
  %419 = vmatpush2.msra.mxu0 0.0
  %420 = vmatprep.subr.mxu0 0.0
  %421 = vmatpush2.msra.mxu0 0.0
  %422 = vmatprep.subr.mxu0 0.0
  %423 = vmatpush2.msra.mxu0 0.0
  %424 = vmatprep.subr.mxu0 0.0
  %425 = vmatpush2.msra.mxu0 0.0
  %426 = vmatprep.subr.mxu0 0.0
  %427 = vmatpush2.msra.mxu0 0.0
  %428 = vmatprep.subr.mxu0 0.0
  %429 = vmatpush2.msra.mxu0 0.0
  %430 = vmatprep.subr.mxu0 0.0
  %431 = vmatpush2.msra.mxu0 0.0
  %432 = vmatprep.subr.mxu0 0.0
  %433 = vmatpush2.msra.mxu0 0.0
  %434 = vmatprep.subr.mxu0 0.0
  %435 = vmatpush2.msra.mxu0 0.0
  %436 = vmatprep.subr.mxu0 0.0
  %437 = vmatpush2.msra.mxu0 0.0
  %438 = vmatprep.subr.mxu0 0.0
  %439 = vmatpush2.msra.mxu0 0.0
  %440 = vmatprep.subr.mxu0 0.0
  %441 = vmatpush2.msra.mxu0 0.0
  %442 = vmatprep.mubr.f32.mxu0 0.0
  %443 = vmatmul.mubr.f32.gmra.mxu0 %v266
  %v444 = vpop.f32.mrf.mxu0
  %v445 = vadd.f32 %v301, %v444
  %v446 = vpop.f32.mrf.mxu0
  %447 = vmatprep.mubr.f32.mxu0 0.0
  %448 = vmatmul.mubr.f32.gmra.mxu0 %v267
  %v449 = vpop.f32.mrf.mxu0
  %v450 = vadd.f32 %v306, %v449
  %v451 = vpop.f32.mrf.mxu0
  %452 = vmatprep.mubr.f32.mxu0 0.0
  %453 = vmatmul.mubr.f32.gmra.mxu0 %v268
  %v454 = vpop.f32.mrf.mxu0
  %v455 = vadd.f32 %v311, %v454
  %v456 = vpop.f32.mrf.mxu0
  %457 = vmatprep.mubr.f32.mxu0 0.0
  %458 = vmatmul.mubr.f32.gmra.mxu0 %v269
  %v459 = vpop.f32.mrf.mxu0
  %v460 = vadd.f32 %v316, %v459
  %v461 = vpop.f32.mrf.mxu0
  %462 = vmatprep.mubr.f32.mxu0 0.0
  %463 = vmatmul.mubr.f32.gmra.mxu0 %v270
  %v464 = vpop.f32.mrf.mxu0
  %v465 = vadd.f32 %v321, %v464
  %v466 = vpop.f32.mrf.mxu0
  %467 = vmatprep.mubr.f32.mxu0 0.0
  %468 = vmatmul.mubr.f32.gmra.mxu0 %v271
  %v469 = vpop.f32.mrf.mxu0
  %v470 = vadd.f32 %v326, %v469
  %v471 = vpop.f32.mrf.mxu0
  %472 = vmatprep.mubr.f32.mxu0 0.0
  %473 = vmatmul.mubr.f32.gmra.mxu0 %v272
  %v474 = vpop.f32.mrf.mxu0
  %v475 = vadd.f32 %v331, %v474
  %v476 = vpop.f32.mrf.mxu0
  %477 = vmatprep.mubr.f32.mxu0 0.0
  %478 = vmatmul.mubr.f32.gmra.mxu0 %v273
  %v479 = vpop.f32.mrf.mxu0
  %v480 = vadd.f32 %v336, %v479
  %v481 = vpop.f32.mrf.mxu0
  %482 = vmatprep.mubr.f32.mxu0 0.0
  %483 = vmatmul.mubr.f32.gmra.mxu0 %v274
  %v484 = vpop.f32.mrf.mxu0
  %v485 = vadd.f32 %v341, %v484
  %v486 = vpop.f32.mrf.mxu0
  %487 = vmatprep.mubr.f32.mxu0 0.0
  %488 = vmatmul.mubr.f32.gmra.mxu0 %v275
  %v489 = vpop.f32.mrf.mxu0
  %v490 = vadd.f32 %v346, %v489
  %v491 = vpop.f32.mrf.mxu0
  %492 = vmatprep.mubr.f32.mxu0 0.0
  %493 = vmatmul.mubr.f32.gmra.mxu0 %v276
  %v494 = vpop.f32.mrf.mxu0
  %v495 = vadd.f32 %v351, %v494
  %v496 = vpop.f32.mrf.mxu0
  %497 = vmatprep.mubr.f32.mxu0 0.0
  %498 = vmatmul.mubr.f32.gmra.mxu0 %v277
  %v499 = vpop.f32.mrf.mxu0
  %v500 = vadd.f32 %v356, %v499
  %v501 = vpop.f32.mrf.mxu0
  %502 = vmatprep.mubr.f32.mxu0 0.0
  %503 = vmatmul.mubr.f32.gmra.mxu0 %v278
  %v504 = vpop.f32.mrf.mxu0
  %v505 = vadd.f32 %v361, %v504
  %v506 = vpop.f32.mrf.mxu0
  %507 = vmatprep.mubr.f32.mxu0 0.0
  %508 = vmatmul.mubr.f32.gmra.mxu0 %v279
  %v509 = vpop.f32.mrf.mxu0
  %v510 = vadd.f32 %v366, %v509
  %v511 = vpop.f32.mrf.mxu0
  %512 = vmatprep.mubr.f32.mxu0 0.0
  %513 = vmatmul.mubr.f32.gmra.mxu0 %v280
  %v514 = vpop.f32.mrf.mxu0
  %v515 = vadd.f32 %v371, %v514
  %v516 = vpop.f32.mrf.mxu0
  %517 = vmatprep.mubr.f32.mxu0 0.0
  %518 = vmatmul.mubr.f32.gmra.mxu0 %v281
  %v519 = vpop.f32.mrf.mxu0
  %v520 = vadd.f32 %v376, %v519
  %v521 = vpop.f32.mrf.mxu0
  %522 = vdwg.mxu0
  %v523 = vmul.f32 %v445, 0.2
  %v524 = vmul.f32 %v450, 0.2
  %v525 = vmul.f32 %v455, 0.2
  %v526 = vmul.f32 %v460, 0.2
  %v527 = vmul.f32 %v465, 0.2
  %v528 = vmul.f32 %v470, 0.2
  %v529 = vmul.f32 %v475, 0.2
  %v530 = vmul.f32 %v480, 0.2
  %v531 = vmul.f32 %v485, 0.2
  %v532 = vmul.f32 %v490, 0.2
  %v533 = vmul.f32 %v495, 0.2
  %v534 = vmul.f32 %v500, 0.2
  %v535 = vmul.f32 %v505, 0.2
  %v536 = vmul.f32 %v510, 0.2
  %v537 = vmul.f32 %v515, 0.2
  %v538 = vmul.f32 %v520, 0.2
  %v539 = vmax.f32 %v445, %v523
  %v540 = vmax.f32 %v450, %v524
  %v541 = vmax.f32 %v455, %v525
  %v542 = vmax.f32 %v460, %v526
  %v543 = vmax.f32 %v465, %v527
  %v544 = vmax.f32 %v470, %v528
  %v545 = vmax.f32 %v475, %v529
  %v546 = vmax.f32 %v480, %v530
  %v547 = vmax.f32 %v485, %v531
  %v548 = vmax.f32 %v490, %v532
  %v549 = vmax.f32 %v495, %v533
  %v550 = vmax.f32 %v500, %v534
  %v551 = vmax.f32 %v505, %v535
  %v552 = vmax.f32 %v510, %v536
  %v553 = vmax.f32 %v515, %v537
  %v554 = vmax.f32 %v520, %v538
  %v555 = vld [vmem:[%s4] sm:$0xff]
  %v556 = vld [vmem:[%s5] sm:$0xff]
  %558 = vset.pattern.permute.xlu0 0
  %559 = vperm.xlu0 %558, %v556
  %v560 = vpop.permute.xlu0 %559
  %562 = vmatprep.subr.mxu0 0.0
  %563 = vmatpush1.msra.mxu0 %v554
  %564 = vmatprep.subr.mxu0 0.0
  %565 = vmatpush1.msra.mxu0 %v553
  %566 = vmatprep.subr.mxu0 0.0
  %567 = vmatpush1.msra.mxu0 %v552
  %568 = vmatprep.subr.mxu0 0.0
  %569 = vmatpush1.msra.mxu0 %v551
  %570 = vmatprep.subr.mxu0 0.0
  %571 = vmatpush1.msra.mxu0 %v550
  %572 = vmatprep.subr.mxu0 0.0
  %573 = vmatpush1.msra.mxu0 %v549
  %574 = vmatprep.subr.mxu0 0.0
  %575 = vmatpush1.msra.mxu0 %v548
  %576 = vmatprep.subr.mxu0 0.0
  %577 = vmatpush1.msra.mxu0 %v547
  %578 = vmatprep.subr.mxu0 0.0
  %579 = vmatpush1.msra.mxu0 %v546
  %580 = vmatprep.subr.mxu0 0.0
  %581 = vmatpush1.msra.mxu0 %v545
  %582 = vmatprep.subr.mxu0 0.0
  %583 = vmatpush1.msra.mxu0 %v544
  %584 = vmatprep.subr.mxu0 0.0
  %585 = vmatpush1.msra.mxu0 %v543
  %586 = vmatprep.subr.mxu0 0.0
  %587 = vmatpush1.msra.mxu0 %v542
  %588 = vmatprep.subr.mxu0 0.0
  %589 = vmatpush1.msra.mxu0 %v541
  %590 = vmatprep.subr.mxu0 0.0
  %591 = vmatpush1.msra.mxu0 %v540
  %592 = vmatprep.subr.mxu0 0.0
  %593 = vmatpush1.msra.mxu0 %v539
  %594 = vmatprep.subr.mxu0 0.0
  %595 = vmatpush2.msra.mxu0 0.0
  %596 = vmatprep.subr.mxu0 0.0
  %597 = vmatpush2.msra.mxu0 0.0
  %598 = vmatprep.subr.mxu0 0.0
  %599 = vmatpush2.msra.mxu0 0.0
  %600 = vmatprep.subr.mxu0 0.0
  %601 = vmatpush2.msra.mxu0 0.0
  %602 = vmatprep.subr.mxu0 0.0
  %603 = vmatpush2.msra.mxu0 0.0
  %604 = vmatprep.subr.mxu0 0.0
  %605 = vmatpush2.msra.mxu0 0.0
  %606 = vmatprep.subr.mxu0 0.0
  %607 = vmatpush2.msra.mxu0 0.0
  %608 = vmatprep.subr.mxu0 0.0
  %609 = vmatpush2.msra.mxu0 0.0
  %610 = vmatprep.subr.mxu0 0.0
  %611 = vmatpush2.msra.mxu0 0.0
  %612 = vmatprep.subr.mxu0 0.0
  %613 = vmatpush2.msra.mxu0 0.0
  %614 = vmatprep.subr.mxu0 0.0
  %615 = vmatpush2.msra.mxu0 0.0
  %616 = vmatprep.subr.mxu0 0.0
  %617 = vmatpush2.msra.mxu0 0.0
  %618 = vmatprep.subr.mxu0 0.0
  %619 = vmatpush2.msra.mxu0 0.0
  %620 = vmatprep.subr.mxu0 0.0
  %621 = vmatpush2.msra.mxu0 0.0
  %622 = vmatprep.subr.mxu0 0.0
  %623 = vmatpush2.msra.mxu0 0.0
  %624 = vmatprep.subr.mxu0 0.0
  %625 = vmatpush2.msra.mxu0 0.0
  %626 = vmatprep.mubr.f32.mxu0 0.0
  %627 = vmatmul.mubr.f32.gmra.mxu0 %v555
  %v628 = vpop.f32.mrf.mxu0
  %v629 = vadd.f32 %v560, %v628
  %v630 = vpop.f32.mrf.mxu0
  %631 = vdwg.mxu0
  %632 = vst [vmem:[%s6] sm:$0xff] %v629
  // Predicated region
  $region26: #{position_model_forward.1} parent=0 // pred_check
    _
  $region27: #{position_model_forward.1} parent=0 // pred_check_branch
    %634 = sbr.rel (0) target = $region29
  $region28: #{position_model_forward.1} parent=0 // pred_region
    _
  $region29: #{position_model_forward.1} parent=0 // pred_fallthru
    _
  // Predicated region
  $region30: #{position_model_forward.1} parent=0 // pred_check
    _
  $region31: #{position_model_forward.1} parent=0 // pred_check_branch
    %636 = sbr.rel (0) target = $region33
  $region32: #{position_model_forward.1} parent=0 // pred_region
    _
  $region33: #{position_model_forward.1} parent=0 // pred_fallthru
    _

</llo_original>
